<compile_context>
chip_gen: v5e
topology: v5e:2x2
jax: 0.10.0
libtpu: 0.0.40
codegen_flags: <defaults>
</compile_context>

<pallas_src>
import functools
import math

import jax
import jax.numpy as jnp
from jax.experimental import pallas as pl
from jax.experimental.pallas import tpu as pltpu


# ---------------------------------------------------------------------------
# Kernel A: fused pre-LayerNorm1 + packed QKV projection (row-tiled over B*S)
# ---------------------------------------------------------------------------
def _ln_qkv_kernel(x_ref, g_ref, b_ref, w_ref, wb_ref,
                   xln_ref, q_ref, k_ref, v_ref, *, eps):
    # x_ref:   (TM, H)   input rows
    # g_ref:   (1, H)    LN1 gamma (f32)          -- VMEM-resident
    # b_ref:   (1, H)    LN1 beta  (f32)          -- VMEM-resident
    # w_ref:   (H, 3H)   packed [Wq*scale | Wk | Wv], [in, out] layout -- resident
    # wb_ref:  (1, 3H)   packed [bq*scale | bk | bv] (f32)             -- resident
    # xln_ref: (TM, H)   LN1 output (residual for kernel B)
    # q/k/v_ref: (TM, H) projections (1/sqrt(hd) already folded into Q)
    H = x_ref.shape[-1]
    x = x_ref[...].astype(jnp.float32)
    mean = jnp.mean(x, axis=-1, keepdims=True)
    xc = x - mean
    var = jnp.mean(xc * xc, axis=-1, keepdims=True)
    inv = jax.lax.rsqrt(var + eps)
    xln = xc * inv * g_ref[...] + b_ref[...]
    xln_c = xln.astype(xln_ref.dtype)
    xln_ref[...] = xln_c
    # Plain (TM,H)x(H,3H) matmul; weight is pre-transposed on the host so no
    # per-step transpose is needed on the XLU.
    acc = jnp.dot(xln_c, w_ref[...], preferred_element_type=jnp.float32)
    acc = acc + wb_ref[...]
    q_ref[...] = acc[:, :H].astype(q_ref.dtype)
    k_ref[...] = acc[:, H:2 * H].astype(k_ref.dtype)
    v_ref[...] = acc[:, 2 * H:].astype(v_ref.dtype)


# ---------------------------------------------------------------------------
# Kernel B: per-batch multi-head attention + output proj + residual + LN2
# ---------------------------------------------------------------------------
def _attn_out_kernel(q_ref, k_ref, v_ref, res_ref, wo_ref, wob_ref,
                     g_ref, b_ref, o_ref, *, num_heads, eps):
    # q/k/v/res_ref: (1, S, H) lane-dense per-batch slabs (heads sliced in-kernel)
    # wo_ref:  (H, H)  output dense weight, [in, out] layout -- VMEM-resident
    # wob_ref: (1, H)  output dense bias (f32)               -- resident
    # g_ref/b_ref: (1, H) LN2 gamma / beta (f32)             -- resident
    # o_ref:   (1, S, H) final block output
    H = q_ref.shape[2]
    hd = H // num_heads
    q = q_ref[0]
    k = k_ref[0]
    v = v_ref[0]

    ctx_parts = []
    for h in range(num_heads):              # static unrolled loop over heads
        sl = slice(h * hd, (h + 1) * hd)
        qh = q[:, sl]
        kh = k[:, sl]
        vh = v[:, sl]
        # scores = (Q*scale) K^T : scale already folded into Wq/bq on the host.
        s = jax.lax.dot_general(qh, kh, (((1,), (1,)), ((), ())),
                                preferred_element_type=jnp.float32)   # (S, S)
        m = jnp.max(s, axis=-1, keepdims=True)
        p = jnp.exp(s - m)
        l = jnp.sum(p, axis=-1, keepdims=True)
        # EUP reciprocal (co-issues with VPU/MXU work) + one Newton refinement
        # step so accuracy is effectively exact at negligible VPU cost.
        inv_l = pl.reciprocal(l, approx=True)
        inv_l = inv_l * (2.0 - l * inv_l)
        p = p * inv_l
        # TODO(synk): attention-prob dropout / head_mask are identity / None here.
        ctx_parts.append(jnp.dot(p.astype(vh.dtype), vh,
                                 preferred_element_type=jnp.float32))  # (S, hd)
    # TODO(synk): for long sequences replace the full SxS per-head softmax with a
    # KV-tiled online-softmax (flash) loop to bound the VMEM working set.
    ctx = jnp.concatenate(ctx_parts, axis=-1)                          # (S, H) f32

    # Output projection (+ bias) + residual (LN1 output) + LayerNorm2.
    y = jnp.dot(ctx.astype(wo_ref.dtype), wo_ref[...],
                preferred_element_type=jnp.float32)
    # TODO(synk): hidden-state dropout is identity in eval mode.
    y = y + wob_ref[...] + res_ref[0].astype(jnp.float32)
    mean = jnp.mean(y, axis=-1, keepdims=True)
    yc = y - mean
    var = jnp.mean(yc * yc, axis=-1, keepdims=True)
    inv = jax.lax.rsqrt(var + eps)
    o_ref[0] = (yc * inv * g_ref[...] + b_ref[...]).astype(o_ref.dtype)


# ---------------------------------------------------------------------------
# Wrapper helpers
# ---------------------------------------------------------------------------
def _row_tile(m, tile_m):
    """Row-tile size: 8-aligned, <= tile_m, and grid >= 2 when possible (v7x)."""
    if m <= 8:
        return m
    tm = min(tile_m, m)
    half = -(-m // 2)                 # ceil(m/2)
    half = -(-half // 8) * 8          # round up to multiple of 8
    tm = min(tm, half)
    tm = max(8, (tm // 8) * 8)
    return tm


def _vmem_limit_bytes(working_set_bytes):
    try:
        cap = int(pltpu.get_tpu_info().vmem_capacity_bytes)
    except Exception:
        cap = 64 * 1024 * 1024        # conservative (v7x-sized) fallback
    budget = (cap * 3) // 4           # leave headroom for Mosaic scratch/sems
    want = max(4 * int(working_set_bytes), 32 * 1024 * 1024)
    return int(min(want, budget))


def _compiler_params(working_set_bytes):
    return pltpu.CompilerParams(
        dimension_semantics=("parallel",),
        vmem_limit_bytes=_vmem_limit_bytes(working_set_bytes),
    )


# ---------------------------------------------------------------------------
# Public entry point
# ---------------------------------------------------------------------------
def pre_ln_bert_attention(hidden_states, params, *, num_heads,
                          eps=1e-12, compute_dtype=None, tile_m=1024):
    """Forward of PreLNBertAttention.

    hidden_states: [B, S, H].
    params: ln1_gamma/ln1_beta/ln2_gamma/ln2_beta [H]; wq/wk/wv/wo [H, H] in
      PyTorch nn.Linear [out, in] layout; bq/bk/bv/bo [H].
    compute_dtype: dtype fed to the MXU (bf16 recommended on v5e; accumulation
      is always f32). Defaults to the input dtype.
    tile_m: row-tile size for the LN+QKV kernel (1024-2048 on v5e/v6e,
      ~512 on v7x). It is automatically shrunk so the grid has >= 2 steps.
    """
    B, S, H = hidden_states.shape
    if H % num_heads:
        raise ValueError("hidden size must be divisible by num_heads")
    hd = H // num_heads
    M = B * S
    out_dtype = hidden_states.dtype
    cdtype = jnp.dtype(compute_dtype) if compute_dtype is not None else jnp.dtype(out_dtype)
    csize = cdtype.itemsize
    osize = jnp.dtype(out_dtype).itemsize
    f32 = jnp.float32
    scale = 1.0 / math.sqrt(hd)

    tm = _row_tile(M, tile_m)
    grid_m = pl.cdiv(M, tm)

    x2d = hidden_states.reshape(M, H).astype(cdtype)

    g1 = params["ln1_gamma"].reshape(1, H).astype(f32)
    b1 = params["ln1_beta"].reshape(1, H).astype(f32)
    g2 = params["ln2_gamma"].reshape(1, H).astype(f32)
    b2 = params["ln2_beta"].reshape(1, H).astype(f32)

    # One-time host/XLA-side param prep (amortized over every tile):
    #   * 1/sqrt(head_dim) folded into Wq / bq
    #   * weights transposed once to [in, out] so kernels do plain (M,K)x(K,N)
    w_qkv = jnp.concatenate([params["wq"].astype(f32) * scale,
                             params["wk"].astype(f32),
                             params["wv"].astype(f32)], axis=0)      # [3H, H]
    w_qkv_t = jnp.transpose(w_qkv).astype(cdtype)                    # [H, 3H]
    b_qkv = jnp.concatenate([params["bq"].astype(f32) * scale,
                             params["bk"].astype(f32),
                             params["bv"].astype(f32)]).reshape(1, 3 * H)
    w_o_t = jnp.transpose(params["wo"]).astype(cdtype)               # [H, H]
    b_o = params["bo"].reshape(1, H).astype(f32)

    # ---- Kernel A: LayerNorm1 + packed QKV projection -----------------------
    # NOTE: constant-index weight blocks are small relative to VMEM here;
    # pl.Buffered(1) on them could reclaim the second buffer if needed.
    ws1 = (2 * tm * H * csize + 2 * 4 * tm * H * csize
           + 3 * H * H * csize + 8 * H * 4)
    xln2d, q2d, k2d, v2d = pl.pallas_call(
        functools.partial(_ln_qkv_kernel, eps=float(eps)),
        out_shape=tuple(jax.ShapeDtypeStruct((M, H), cdtype) for _ in range(4)),
        grid=(grid_m,),
        in_specs=[
            pl.BlockSpec((tm, H), lambda i: (i, 0)),
            pl.BlockSpec((1, H), lambda i: (0, 0)),
            pl.BlockSpec((1, H), lambda i: (0, 0)),
            pl.BlockSpec((H, 3 * H), lambda i: (0, 0)),
            pl.BlockSpec((1, 3 * H), lambda i: (0, 0)),
        ],
        out_specs=tuple(pl.BlockSpec((tm, H), lambda i: (i, 0)) for _ in range(4)),
        compiler_params=_compiler_params(ws1),
        cost_estimate=pl.CostEstimate(
            flops=2 * M * H * 3 * H,
            transcendentals=M,
            bytes_accessed=(5 * M * H + 3 * H * H) * csize + 8 * H * 4),
    )(x2d, g1, b1, w_qkv_t, b_qkv)

    # Free reshapes only (contiguous, no transpose / no extra HBM passes).
    q3 = q2d.reshape(B, S, H)
    k3 = k2d.reshape(B, S, H)
    v3 = v2d.reshape(B, S, H)
    res3 = xln2d.reshape(B, S, H)

    # ---- Kernel B: attention (all heads) + output proj + residual + LN2 -----
    ws2 = (2 * 4 * S * H * csize + 2 * S * H * osize
           + H * H * csize + S * S * 4 + S * H * 4 + 3 * H * 4)
    out3 = pl.pallas_call(
        functools.partial(_attn_out_kernel, num_heads=num_heads, eps=float(eps)),
        out_shape=jax.ShapeDtypeStruct((B, S, H), out_dtype),
        grid=(B,),
        in_specs=[
            pl.BlockSpec((1, S, H), lambda b: (b, 0, 0)),
            pl.BlockSpec((1, S, H), lambda b: (b, 0, 0)),
            pl.BlockSpec((1, S, H), lambda b: (b, 0, 0)),
            pl.BlockSpec((1, S, H), lambda b: (b, 0, 0)),
            pl.BlockSpec((H, H), lambda b: (0, 0)),
            pl.BlockSpec((1, H), lambda b: (0, 0)),
            pl.BlockSpec((1, H), lambda b: (0, 0)),
            pl.BlockSpec((1, H), lambda b: (0, 0)),
        ],
        out_specs=pl.BlockSpec((1, S, H), lambda b: (b, 0, 0)),
        compiler_params=_compiler_params(ws2),
        cost_estimate=pl.CostEstimate(
            flops=4 * B * num_heads * S * S * hd + 2 * M * H * H,
            transcendentals=B * num_heads * S * S + M,
            bytes_accessed=(4 * M * H + H * H) * csize + M * H * osize),
    )(q3, k3, v3, res3, w_o_t, b_o, g2, b2)

    return out3


# ---------------------------------------------------------------------------
# Pure-JAX reference and demo
# ---------------------------------------------------------------------------
def _reference(x, params, num_heads, eps):
    def ln(v, g, b):
        mu = jnp.mean(v, axis=-1, keepdims=True)
        var = jnp.mean((v - mu) ** 2, axis=-1, keepdims=True)
        return (v - mu) / jnp.sqrt(var + eps) * g + b

    B, S, H = x.shape
    hd = H // num_heads
    xln = ln(x, params["ln1_gamma"], params["ln1_beta"])
    q = xln @ params["wq"].T + params["bq"]
    k = xln @ params["wk"].T + params["bk"]
    v = xln @ params["wv"].T + params["bv"]

    def split(t):
        return t.reshape(B, S, num_heads, hd).transpose(0, 2, 1, 3)

    qh, kh, vh = split(q), split(k), split(v)
    s = jnp.einsum("bhqd,bhkd->bhqk", qh, kh) / math.sqrt(hd)
    p = jax.nn.softmax(s, axis=-1)
    ctx = jnp.einsum("bhqk,bhkd->bhqd", p, vh)
    ctx = ctx.transpose(0, 2, 1, 3).reshape(B, S, H)
    return ln(ctx @ params["wo"].T + params["bo"] + xln,
              params["ln2_gamma"], params["ln2_beta"])


if __name__ == "__main__":
    # Small but lane-dense config: batch=2, seq=8, hidden=128, heads=4.
    B, S, H, NH = 2, 8, 128, 4
    EPS = 1e-12

    key = jax.random.PRNGKey(0)
    keys = jax.random.split(key, 13)
    bound = 1.0 / math.sqrt(H)

    def _uniform(k, shape):
        return jax.random.uniform(k, shape, minval=-bound, maxval=bound,
                                  dtype=jnp.float32)

    x = jax.random.normal(keys[0], (B, S, H), dtype=jnp.float32)
    params = {
        "ln1_gamma": 1.0 + _uniform(keys[1], (H,)),
        "ln1_beta": _uniform(keys[2], (H,)),
        "ln2_gamma": 1.0 + _uniform(keys[3], (H,)),
        "ln2_beta": _uniform(keys[4], (H,)),
        "wq": _uniform(keys[5], (H, H)), "bq": _uniform(keys[6], (H,)),
        "wk": _uniform(keys[7], (H, H)), "bk": _uniform(keys[8], (H,)),
        "wv": _uniform(keys[9], (H, H)), "bv": _uniform(keys[10], (H,)),
        "wo": _uniform(keys[11], (H, H)), "bo": _uniform(keys[12], (H,)),
    }

    ref = _reference(x, params, NH, EPS)

    # f32 path: correctness check against the pure-JAX reference.
    out_f32 = pre_ln_bert_attention(x, params, num_heads=NH, eps=EPS,
                                    compute_dtype=jnp.float32)
    jax.block_until_ready(out_f32)
    assert out_f32.shape == (B, S, H)
    assert jnp.allclose(out_f32, ref, atol=2e-3, rtol=2e-3), \
        "f32 kernel mismatch vs reference"

    # bf16 I/O path (halved HBM traffic, f32 accumulation): bf16-level check.
    out_bf16 = pre_ln_bert_attention(x, params, num_heads=NH, eps=EPS,
                                     compute_dtype=jnp.bfloat16)
    jax.block_until_ready(out_bf16)
    assert jnp.allclose(out_bf16.astype(jnp.float32), ref,
                        atol=1.5e-1, rtol=1e-1), \
        "bf16 kernel diverged beyond bf16 tolerance"

    print("KERNEL_OK")
</pallas_src>

<mosaic_0001>
module attributes {stable_mosaic.version = 11 : i64} {
  func.func @_ln_qkv_kernel(%arg0: i32, %arg1: memref<8x128xf32, #tpu.memory_space<vmem>>, %arg2: memref<1x128xf32, #tpu.memory_space<vmem>>, %arg3: memref<1x128xf32, #tpu.memory_space<vmem>>, %arg4: memref<128x384xf32, #tpu.memory_space<vmem>>, %arg5: memref<1x384xf32, #tpu.memory_space<vmem>>, %arg6: memref<8x128xf32, #tpu.memory_space<vmem>>, %arg7: memref<8x128xf32, #tpu.memory_space<vmem>>, %arg8: memref<8x128xf32, #tpu.memory_space<vmem>>, %arg9: memref<8x128xf32, #tpu.memory_space<vmem>>) attributes {dimension_semantics = [#tpu.dimension_semantics<parallel>], iteration_bounds = array<i64: 2>, scalar_prefetch = 0 : i64, scratch_operands = 0 : i64, tpu.core_type = #tpu.core_type<tc>, window_params = [{transform_indices = @transform_0, window_bounds = array<i64: 8, 128>}, {pipeline_mode = #tpu.pipeline_mode<synchronous>, transform_indices = @transform_1, window_bounds = array<i64: 1, 128>}, {pipeline_mode = #tpu.pipeline_mode<synchronous>, transform_indices = @transform_2, window_bounds = array<i64: 1, 128>}, {pipeline_mode = #tpu.pipeline_mode<synchronous>, transform_indices = @transform_3, window_bounds = array<i64: 128, 384>}, {pipeline_mode = #tpu.pipeline_mode<synchronous>, transform_indices = @transform_4, window_bounds = array<i64: 1, 384>}, {transform_indices = @transform_5, window_bounds = array<i64: 8, 128>}, {transform_indices = @transform_6, window_bounds = array<i64: 8, 128>}, {transform_indices = @transform_7, window_bounds = array<i64: 8, 128>}, {transform_indices = @transform_8, window_bounds = array<i64: 8, 128>}]} {
    %c0 = arith.constant 0 : index
    %c0_0 = arith.constant 0 : index
    %0 = vector.load %arg1[%c0, %c0_0] : memref<8x128xf32, #tpu.memory_space<vmem>>, vector<8x128xf32>
    %cst = arith.constant dense<0.000000e+00> : vector<8xf32>
    %1 = vector.multi_reduction <add>, %0, %cst [1] : vector<8x128xf32> to vector<8xf32>
    %2 = vector.shape_cast %1 : vector<8xf32> to vector<8x1xf32>
    %cst_1 = arith.constant 1.280000e+02 : f32
    %3 = vector.broadcast %cst_1 : f32 to vector<8x1xf32>
    %4 = arith.divf %2, %3 : vector<8x1xf32>
    %5 = vector.broadcast %4 : vector<8x1xf32> to vector<8x128xf32>
    %6 = arith.subf %0, %5 : vector<8x128xf32>
    %7 = arith.mulf %6, %6 : vector<8x128xf32>
    %cst_2 = arith.constant dense<0.000000e+00> : vector<8xf32>
    %8 = vector.multi_reduction <add>, %7, %cst_2 [1] : vector<8x128xf32> to vector<8xf32>
    %9 = vector.shape_cast %8 : vector<8xf32> to vector<8x1xf32>
    %cst_3 = arith.constant 1.280000e+02 : f32
    %10 = vector.broadcast %cst_3 : f32 to vector<8x1xf32>
    %11 = arith.divf %9, %10 : vector<8x1xf32>
    %cst_4 = arith.constant 9.99999996E-13 : f32
    %12 = vector.broadcast %cst_4 : f32 to vector<8x1xf32>
    %13 = arith.addf %11, %12 : vector<8x1xf32>
    %14 = math.rsqrt %13 : vector<8x1xf32>
    %15 = vector.broadcast %14 : vector<8x1xf32> to vector<8x128xf32>
    %16 = arith.mulf %6, %15 : vector<8x128xf32>
    %c0_5 = arith.constant 0 : index
    %c0_6 = arith.constant 0 : index
    %17 = vector.load %arg2[%c0_5, %c0_6] : memref<1x128xf32, #tpu.memory_space<vmem>>, vector<1x128xf32>
    %18 = vector.broadcast %17 : vector<1x128xf32> to vector<8x128xf32>
    %19 = arith.mulf %16, %18 : vector<8x128xf32>
    %c0_7 = arith.constant 0 : index
    %c0_8 = arith.constant 0 : index
    %20 = vector.load %arg3[%c0_7, %c0_8] : memref<1x128xf32, #tpu.memory_space<vmem>>, vector<1x128xf32>
    %21 = vector.broadcast %20 : vector<1x128xf32> to vector<8x128xf32>
    %22 = arith.addf %19, %21 : vector<8x128xf32>
    %c0_9 = arith.constant 0 : index
    %c0_10 = arith.constant 0 : index
    %23 = vector.load %arg6[%c0_9, %c0_10] : memref<8x128xf32, #tpu.memory_space<vmem>>, vector<8x128xf32>
    tpu.vector_store %arg6[%c0_9, %c0_10], %22 {strides = array<i32>} : memref<8x128xf32, #tpu.memory_space<vmem>>, vector<8x128xf32>,
    %c0_11 = arith.constant 0 : index
    %c0_12 = arith.constant 0 : index
    %24 = vector.load %arg4[%c0_11, %c0_12] : memref<128x384xf32, #tpu.memory_space<vmem>>, vector<128x384xf32>
    %cst_13 = arith.constant dense<0.000000e+00> : vector<8x384xf32>
    %25 = tpu.matmul %22, %24, %cst_13 {dimension_numbers = #tpu.dot_dimension_numbers<[1], [0], [0], [1], [0, 0, 1, 1], [], []>} : vector<8x128xf32>, vector<128x384xf32>, vector<8x384xf32> -> vector<8x384xf32>
    %c0_14 = arith.constant 0 : index
    %c0_15 = arith.constant 0 : index
    %26 = vector.load %arg5[%c0_14, %c0_15] : memref<1x384xf32, #tpu.memory_space<vmem>>, vector<1x384xf32>
    %27 = vector.broadcast %26 : vector<1x384xf32> to vector<8x384xf32>
    %28 = arith.addf %25, %27 : vector<8x384xf32>
    %29 = vector.extract_strided_slice %28 {offsets = [0, 0], sizes = [8, 128], strides = [1, 1]} : vector<8x384xf32> to vector<8x128xf32>
    %c0_16 = arith.constant 0 : index
    %c0_17 = arith.constant 0 : index
    %30 = vector.load %arg7[%c0_16, %c0_17] : memref<8x128xf32, #tpu.memory_space<vmem>>, vector<8x128xf32>
    tpu.vector_store %arg7[%c0_16, %c0_17], %29 {strides = array<i32>} : memref<8x128xf32, #tpu.memory_space<vmem>>, vector<8x128xf32>,
    %31 = vector.extract_strided_slice %28 {offsets = [0, 128], sizes = [8, 128], strides = [1, 1]} : vector<8x384xf32> to vector<8x128xf32>
    %c0_18 = arith.constant 0 : index
    %c0_19 = arith.constant 0 : index
    %32 = vector.load %arg8[%c0_18, %c0_19] : memref<8x128xf32, #tpu.memory_space<vmem>>, vector<8x128xf32>
    tpu.vector_store %arg8[%c0_18, %c0_19], %31 {strides = array<i32>} : memref<8x128xf32, #tpu.memory_space<vmem>>, vector<8x128xf32>,
    %33 = vector.extract_strided_slice %28 {offsets = [0, 256], sizes = [8, 128], strides = [1, 1]} : vector<8x384xf32> to vector<8x128xf32>
    %c0_20 = arith.constant 0 : index
    %c0_21 = arith.constant 0 : index
    %34 = vector.load %arg9[%c0_20, %c0_21] : memref<8x128xf32, #tpu.memory_space<vmem>>, vector<8x128xf32>
    tpu.vector_store %arg9[%c0_20, %c0_21], %33 {strides = array<i32>} : memref<8x128xf32, #tpu.memory_space<vmem>>, vector<8x128xf32>,
    return
  }
  func.func @transform_0(%arg0: i32) -> (i32, i32) {
    %c0_i32 = arith.constant 0 : i32
    %c0_i32_0 = arith.constant 0 : i32
    return %arg0, %c0_i32 : i32, i32
  }
  func.func @transform_1(%arg0: i32) -> (i32, i32) {
    %c0_i32 = arith.constant 0 : i32
    %c0_i32_0 = arith.constant 0 : i32
    %c0_i32_1 = arith.constant 0 : i32
    return %c0_i32, %c0_i32_0 : i32, i32
  }
  func.func @transform_2(%arg0: i32) -> (i32, i32) {
    %c0_i32 = arith.constant 0 : i32
    %c0_i32_0 = arith.constant 0 : i32
    %c0_i32_1 = arith.constant 0 : i32
    return %c0_i32, %c0_i32_0 : i32, i32
  }
  func.func @transform_3(%arg0: i32) -> (i32, i32) {
    %c0_i32 = arith.constant 0 : i32
    %c0_i32_0 = arith.constant 0 : i32
    %c0_i32_1 = arith.constant 0 : i32
    return %c0_i32, %c0_i32_0 : i32, i32
  }
  func.func @transform_4(%arg0: i32) -> (i32, i32) {
    %c0_i32 = arith.constant 0 : i32
    %c0_i32_0 = arith.constant 0 : i32
    %c0_i32_1 = arith.constant 0 : i32
    return %c0_i32, %c0_i32_0 : i32, i32
  }
  func.func @transform_5(%arg0: i32) -> (i32, i32) {
    %c0_i32 = arith.constant 0 : i32
    %c0_i32_0 = arith.constant 0 : i32
    return %arg0, %c0_i32 : i32, i32
  }
  func.func @transform_6(%arg0: i32) -> (i32, i32) {
    %c0_i32 = arith.constant 0 : i32
    %c0_i32_0 = arith.constant 0 : i32
    return %arg0, %c0_i32 : i32, i32
  }
  func.func @transform_7(%arg0: i32) -> (i32, i32) {
    %c0_i32 = arith.constant 0 : i32
    %c0_i32_0 = arith.constant 0 : i32
    return %arg0, %c0_i32 : i32, i32
  }
  func.func @transform_8(%arg0: i32) -> (i32, i32) {
    %c0_i32 = arith.constant 0 : i32
    %c0_i32_0 = arith.constant 0 : i32
    return %arg0, %c0_i32 : i32, i32
  }
}

</mosaic_0001>

<llo_original>
// kernel: tpu_custom_call.1
$region0: #{tpu_custom_call.1}
  #allocation0 [shape = 'u32[]', space=smem, size = 0x4, offset = 0x4, fixed_abs, tag = 'smem constant byte address 0x4 - core index']
  #allocation1 [shape = 'u32[72,128]{1,0:T(1,128)}', space=vmem, size = 0x9000, scoped, tag = 'internal scratch']
  %s0 = inlined_call_operand.hbm [shape: f32[16,128], index: 0, kind: input, shape index: {}]
  %s1 = inlined_call_operand.hbm [shape: f32[1,128], index: 1, kind: input, shape index: {}]
  %s2 = inlined_call_operand.hbm [shape: f32[1,128], index: 2, kind: input, shape index: {}]
  %s3 = inlined_call_operand.hbm [shape: f32[128,384], index: 3, kind: input, shape index: {}]
  %s4 = inlined_call_operand.vmem [shape: f32[1,384], index: 4, kind: input, shape index: {}]
  %s5 = inlined_call_operand.hbm [shape: f32[16,128], index: 5, kind: output, shape index: {0}]
  %s6 = inlined_call_operand.hbm [shape: f32[16,128], index: 6, kind: output, shape index: {1}]
  %s7 = inlined_call_operand.hbm [shape: f32[16,128], index: 7, kind: output, shape index: {2}]
  %s8 = inlined_call_operand.hbm [shape: f32[16,128], index: 8, kind: output, shape index: {3}]
  %9 = xla_tuple %s5, %s6, %s7, %s8
  %s10 = sld [smem:[#allocation0]]
  $region93: #{tpu_custom_call.1} parent=0
    _
  %s12 = ssub.s32 1, %s10
  %s13 = scalar_select 0, %s12, %s10
  $region1: #{tpu_custom_call.1} parent=0
    #allocation2 [shape = 'u8[8192]{0}', space=vmem, size = 0x2000, scoped, tag = 'input window, operand 0']
    #allocation3 [shape = 's32[2]{0}', space=sflag, size = 0x8, scoped, tag = 'scoped memory for tpu_custom_call.1']
    #allocation4 [shape = 's32[2]{0}', space=sflag, size = 0x8, scoped, tag = 'scoped memory for tpu_custom_call.1']
    #allocation5 [shape = 'u8[512]{0}', space=vmem, size = 0x400, scoped, tag = 'input window, operand 1, single buffered']
    #allocation6 [shape = 's32[1]{0}', space=sflag, size = 0x4, scoped, tag = 'scoped memory for tpu_custom_call.1']
    #allocation7 [shape = 'u8[512]{0}', space=vmem, size = 0x400, scoped, tag = 'input window, operand 2, single buffered']
    #allocation8 [shape = 'u8[196608]{0}', space=vmem, size = 0x30000, scoped, tag = 'input window, operand 3, single buffered']
    #allocation9 [shape = 's32[1]{0}', space=sflag, size = 0x4, scoped, tag = 'scoped memory for tpu_custom_call.1']
    #allocation10 [shape = 'u8[8192]{0}', space=vmem, size = 0x2000, scoped, tag = 'output window, operand 0']
    #allocation11 [shape = 'u8[8192]{0}', space=vmem, size = 0x2000, scoped, tag = 'output window, operand 1']
    #allocation12 [shape = 's32[2]{0}', space=sflag, size = 0x8, scoped, tag = 'scoped memory for tpu_custom_call.1']
    #allocation13 [shape = 'u8[8192]{0}', space=vmem, size = 0x2000, scoped, tag = 'output window, operand 2']
    #allocation14 [shape = 'u8[8192]{0}', space=vmem, size = 0x2000, scoped, tag = 'output window, operand 3']
    #allocation15 [shape = 's32[2]{0}', space=sflag, size = 0x8, scoped, tag = 'scoped memory for tpu_custom_call.1']
    %14 = vsyncpa [#allocation3], 0
    %s15 = scalar_lea.sflag [#allocation3], 1
    %16 = vsyncpa %s15, 0
    %17 = vsyncpa [#allocation6], 0
    %18 = vsyncpa [#allocation9], 0
    %19 = vsyncpa [#allocation4], 0
    %s20 = scalar_lea.sflag [#allocation4], 1
    %21 = vsyncpa %s20, 0
    %22 = vsyncpa [#allocation12], 0
    %s23 = scalar_lea.sflag [#allocation12], 1
    %24 = vsyncpa %s23, 0
    %25 = vsyncpa [#allocation15], 0
    %s26 = scalar_lea.sflag [#allocation15], 1
    %27 = vsyncpa %s26, 0
    loop: start=0, step=1, limit=4
    $region2: #{tpu_custom_call.1} parent=1 // loop_pre_header
      _
    $region3: #{tpu_custom_call.1} parent=1 // loop_header
      %s29 = sphi 0, %s33
      %p30 = scmp.ge.s32.totalorder %s29, 4
      %s39 = sphi 0, %s41
      %s42 = sphi 0, %s39
      %s43 = sphi 0, %s42
      %s59 = sphi 0, %s43
      %s63 = sphi 0, %s63
      %s65 = sphi 0, %s63
      %s66 = sphi 0, %s65
      %s80 = sphi 0, %s66
      %s84 = sphi 0, %s84
      %s86 = sphi 0, %s84
      %s87 = sphi 0, %s86
      %s101 = sphi 0, %s87
      %s105 = sphi 0, %s105
      %s107 = sphi 0, %s105
      %s108 = sphi 0, %s107
      %s122 = sphi 0, %s108
      %s126 = sphi 0, %s126
      %s128 = sphi 0, %s126
      %s129 = sphi 0, %s128
      %s143 = sphi 0, %s129
      %s149 = sphi 0, %s151
      %s152 = sphi 0, %s149
      %s153 = sphi 0, %s152
      %s169 = sphi 0, %s153
      %s175 = sphi 0, %s177
      %s178 = sphi 0, %s175
      %s179 = sphi 0, %s178
      %s195 = sphi 0, %s179
      %s201 = sphi 0, %s203
      %s204 = sphi 0, %s201
      %s205 = sphi 0, %s204
      %s221 = sphi 0, %s205
      %s227 = sphi 0, %s229
      %s230 = sphi 0, %s227
      %s231 = sphi 0, %s230
      %s247 = sphi 0, %s231
    $region4: #{tpu_custom_call.1} parent=1 // loop_header_branch
      %32 = sbr.rel (%p30) target = $region8
    $region5: #{tpu_custom_call.1} parent=1 // loop_body
      %s34 = ssub.s32 %s29, 1
      %s35 = ssub.s32 %s29, 2
      %s36 = sadd.s32 %s29, 1
      %s37 = ssub.s32 %s29, %s36
      %p38 = scmp.eq.s32.totalorder %s37, 0
      %s40 = sadd.s32 %s39, 1
      %s41 = scalar_select %p38, %s39, %s40
      %p44 = pneg %p38
      %p45 = scmp.eq.s32.totalorder %s29, 1
      %p46 = por %p44, %p45
      %p47 = scmp.ne.s32.totalorder %s39, %s42
      %p48 = scmp.eq.s32.totalorder %s29, 0
      %p49 = por %p47, %p48
      %p50 = scmp.ne.s32.totalorder %s39, %s42
      %p51 = scmp.eq.s32.totalorder %s34, 1
      %p52 = por %p50, %p51
      %p53 = scmp.ne.s32.totalorder %s42, %s43
      %p54 = scmp.eq.s32.totalorder %s34, 0
      %p55 = por %p53, %p54
      %p56 = scmp.ne.s32.totalorder %s42, %s43
      %p57 = scmp.eq.s32.totalorder %s35, 1
      %p58 = por %p56, %p57
      %p60 = scmp.ne.s32.totalorder %s43, %s59
      %p61 = scmp.eq.s32.totalorder %s35, 0
      %p62 = por %p60, %p61
      %s64 = sadd.s32 %s63, 1
      %p67 = scmp.eq.s32.totalorder %s29, 1
      %p68 = scmp.ne.s32.totalorder %s63, %s65
      %p69 = scmp.eq.s32.totalorder %s29, 0
      %p70 = por %p68, %p69
      %p71 = scmp.ne.s32.totalorder %s63, %s65
      %p72 = scmp.eq.s32.totalorder %s34, 1
      %p73 = por %p71, %p72
      %p74 = scmp.ne.s32.totalorder %s65, %s66
      %p75 = scmp.eq.s32.totalorder %s34, 0
      %p76 = por %p74, %p75
      %p77 = scmp.ne.s32.totalorder %s65, %s66
      %p78 = scmp.eq.s32.totalorder %s35, 1
      %p79 = por %p77, %p78
      %p81 = scmp.ne.s32.totalorder %s66, %s80
      %p82 = scmp.eq.s32.totalorder %s35, 0
      %p83 = por %p81, %p82
      %s85 = sadd.s32 %s84, 1
      %p88 = scmp.eq.s32.totalorder %s29, 1
      %p89 = scmp.ne.s32.totalorder %s84, %s86
      %p90 = scmp.eq.s32.totalorder %s29, 0
      %p91 = por %p89, %p90
      %p92 = scmp.ne.s32.totalorder %s84, %s86
      %p93 = scmp.eq.s32.totalorder %s34, 1
      %p94 = por %p92, %p93
      %p95 = scmp.ne.s32.totalorder %s86, %s87
      %p96 = scmp.eq.s32.totalorder %s34, 0
      %p97 = por %p95, %p96
      %p98 = scmp.ne.s32.totalorder %s86, %s87
      %p99 = scmp.eq.s32.totalorder %s35, 1
      %p100 = por %p98, %p99
      %p102 = scmp.ne.s32.totalorder %s87, %s101
      %p103 = scmp.eq.s32.totalorder %s35, 0
      %p104 = por %p102, %p103
      %s106 = sadd.s32 %s105, 1
      %p109 = scmp.eq.s32.totalorder %s29, 1
      %p110 = scmp.ne.s32.totalorder %s105, %s107
      %p111 = scmp.eq.s32.totalorder %s29, 0
      %p112 = por %p110, %p111
      %p113 = scmp.ne.s32.totalorder %s105, %s107
      %p114 = scmp.eq.s32.totalorder %s34, 1
      %p115 = por %p113, %p114
      %p116 = scmp.ne.s32.totalorder %s107, %s108
      %p117 = scmp.eq.s32.totalorder %s34, 0
      %p118 = por %p116, %p117
      %p119 = scmp.ne.s32.totalorder %s107, %s108
      %p120 = scmp.eq.s32.totalorder %s35, 1
      %p121 = por %p119, %p120
      %p123 = scmp.ne.s32.totalorder %s108, %s122
      %p124 = scmp.eq.s32.totalorder %s35, 0
      %p125 = por %p123, %p124
      %s127 = sadd.s32 %s126, 1
      %p130 = scmp.eq.s32.totalorder %s29, 1
      %p131 = scmp.ne.s32.totalorder %s126, %s128
      %p132 = scmp.eq.s32.totalorder %s29, 0
      %p133 = por %p131, %p132
      %p134 = scmp.ne.s32.totalorder %s126, %s128
      %p135 = scmp.eq.s32.totalorder %s34, 1
      %p136 = por %p134, %p135
      %p137 = scmp.ne.s32.totalorder %s128, %s129
      %p138 = scmp.eq.s32.totalorder %s34, 0
      %p139 = por %p137, %p138
      %p140 = scmp.ne.s32.totalorder %s128, %s129
      %p141 = scmp.eq.s32.totalorder %s35, 1
      %p142 = por %p140, %p141
      %p144 = scmp.ne.s32.totalorder %s129, %s143
      %p145 = scmp.eq.s32.totalorder %s35, 0
      %p146 = por %p144, %p145
      %s147 = ssub.s32 %s29, %s36
      %p148 = scmp.eq.s32.totalorder %s147, 0
      %s150 = sadd.s32 %s149, 1
      %s151 = scalar_select %p148, %s149, %s150
      %p154 = pneg %p148
      %p155 = scmp.eq.s32.totalorder %s29, 1
      %p156 = por %p154, %p155
      %p157 = scmp.ne.s32.totalorder %s149, %s152
      %p158 = scmp.eq.s32.totalorder %s29, 0
      %p159 = por %p157, %p158
      %p160 = scmp.ne.s32.totalorder %s149, %s152
      %p161 = scmp.eq.s32.totalorder %s34, 1
      %p162 = por %p160, %p161
      %p163 = scmp.ne.s32.totalorder %s152, %s153
      %p164 = scmp.eq.s32.totalorder %s34, 0
      %p165 = por %p163, %p164
      %p166 = scmp.ne.s32.totalorder %s152, %s153
      %p167 = scmp.eq.s32.totalorder %s35, 1
      %p168 = por %p166, %p167
      %p170 = scmp.ne.s32.totalorder %s153, %s169
      %p171 = scmp.eq.s32.totalorder %s35, 0
      %p172 = por %p170, %p171
      %s173 = ssub.s32 %s29, %s36
      %p174 = scmp.eq.s32.totalorder %s173, 0
      %s176 = sadd.s32 %s175, 1
      %s177 = scalar_select %p174, %s175, %s176
      %p180 = pneg %p174
      %p181 = scmp.eq.s32.totalorder %s29, 1
      %p182 = por %p180, %p181
      %p183 = scmp.ne.s32.totalorder %s175, %s178
      %p184 = scmp.eq.s32.totalorder %s29, 0
      %p185 = por %p183, %p184
      %p186 = scmp.ne.s32.totalorder %s175, %s178
      %p187 = scmp.eq.s32.totalorder %s34, 1
      %p188 = por %p186, %p187
      %p189 = scmp.ne.s32.totalorder %s178, %s179
      %p190 = scmp.eq.s32.totalorder %s34, 0
      %p191 = por %p189, %p190
      %p192 = scmp.ne.s32.totalorder %s178, %s179
      %p193 = scmp.eq.s32.totalorder %s35, 1
      %p194 = por %p192, %p193
      %p196 = scmp.ne.s32.totalorder %s179, %s195
      %p197 = scmp.eq.s32.totalorder %s35, 0
      %p198 = por %p196, %p197
      %s199 = ssub.s32 %s29, %s36
      %p200 = scmp.eq.s32.totalorder %s199, 0
      %s202 = sadd.s32 %s201, 1
      %s203 = scalar_select %p200, %s201, %s202
      %p206 = pneg %p200
      %p207 = scmp.eq.s32.totalorder %s29, 1
      %p208 = por %p206, %p207
      %p209 = scmp.ne.s32.totalorder %s201, %s204
      %p210 = scmp.eq.s32.totalorder %s29, 0
      %p211 = por %p209, %p210
      %p212 = scmp.ne.s32.totalorder %s201, %s204
      %p213 = scmp.eq.s32.totalorder %s34, 1
      %p214 = por %p212, %p213
      %p215 = scmp.ne.s32.totalorder %s204, %s205
      %p216 = scmp.eq.s32.totalorder %s34, 0
      %p217 = por %p215, %p216
      %p218 = scmp.ne.s32.totalorder %s204, %s205
      %p219 = scmp.eq.s32.totalorder %s35, 1
      %p220 = por %p218, %p219
      %p222 = scmp.ne.s32.totalorder %s205, %s221
      %p223 = scmp.eq.s32.totalorder %s35, 0
      %p224 = por %p222, %p223
      %s225 = ssub.s32 %s29, %s36
      %p226 = scmp.eq.s32.totalorder %s225, 0
      %s228 = sadd.s32 %s227, 1
      %s229 = scalar_select %p226, %s227, %s228
      %p232 = pneg %p226
      %p233 = scmp.eq.s32.totalorder %s29, 1
      %p234 = por %p232, %p233
      %p235 = scmp.ne.s32.totalorder %s227, %s230
      %p236 = scmp.eq.s32.totalorder %s29, 0
      %p237 = por %p235, %p236
      %p238 = scmp.ne.s32.totalorder %s227, %s230
      %p239 = scmp.eq.s32.totalorder %s34, 1
      %p240 = por %p238, %p239
      %p241 = scmp.ne.s32.totalorder %s230, %s231
      %p242 = scmp.eq.s32.totalorder %s34, 0
      %p243 = por %p241, %p242
      %p244 = scmp.ne.s32.totalorder %s230, %s231
      %p245 = scmp.eq.s32.totalorder %s35, 1
      %p246 = por %p244, %p245
      %p248 = scmp.ne.s32.totalorder %s231, %s247
      %p249 = scmp.eq.s32.totalorder %s35, 0
      %p250 = por %p248, %p249
      %p251 = scmp.le.s32.totalorder 1, %s29
      %p252 = scmp.lt.s32.totalorder %s29, 3
      %p253 = pnand %p251, %p252
      %p254 = pneg %p253
      // Predicated region
      $region9: #{tpu_custom_call.1} parent=5 // pred_check
        _
      $region10: #{tpu_custom_call.1} parent=5 // pred_check_branch
        %256 = sbr.rel (%p253) target = $region12
      $region11: #{tpu_custom_call.1} parent=5 // pred_region
        %s257 = ssub.s32 %s29, 1
        // Predicated region
        $region13: #{tpu_custom_call.1} parent=11 // pred_check
          %p258 = pneg %p76
        $region14: #{tpu_custom_call.1} parent=11 // pred_check_branch
          %260 = sbr.rel (%p258) target = $region16
        $region15: #{tpu_custom_call.1} parent=11 // pred_region
          %262 = vsyncadd [#allocation6], 0
          %s264 = sshll.u32 %s1, 4
          %s265 = int_to_ptr.hbm [resolvable:$true] %s264
          %s266 = sshll.u32 [#allocation5], 4
          %s267 = int_to_ptr.vmem [resolvable:$true] %s266
          %269 = dma.hbm_to_vmem [thread:$0]  %s265, 16, %s267, [#allocation6]
        $region16: #{tpu_custom_call.1} parent=11 // pred_fallthru
          _
        // Predicated region
        $region17: #{tpu_custom_call.1} parent=11 // pred_check
          %p270 = pneg %p97
        $region18: #{tpu_custom_call.1} parent=11 // pred_check_branch
          %272 = sbr.rel (%p270) target = $region20
        $region19: #{tpu_custom_call.1} parent=11 // pred_region
          %274 = vsyncadd [#allocation6], 0
          %s276 = sshll.u32 %s2, 4
          %s277 = int_to_ptr.hbm [resolvable:$true] %s276
          %s278 = sshll.u32 [#allocation7], 4
          %s279 = int_to_ptr.vmem [resolvable:$true] %s278
          %281 = dma.hbm_to_vmem [thread:$0]  %s277, 16, %s279, [#allocation6]
        $region20: #{tpu_custom_call.1} parent=11 // pred_fallthru
          _
        // Predicated region
        $region21: #{tpu_custom_call.1} parent=11 // pred_check
          %p282 = pneg %p118
        $region22: #{tpu_custom_call.1} parent=11 // pred_check_branch
          %284 = sbr.rel (%p282) target = $region24
        $region23: #{tpu_custom_call.1} parent=11 // pred_region
          %286 = vsyncadd [#allocation9], 0
          %s287 = sshll.u32 %s3, 4
          %s288 = int_to_ptr.hbm [resolvable:$true] %s287
          %s289 = sshll.u32 [#allocation8], 4
          %s290 = int_to_ptr.vmem [resolvable:$true] %s289
          %295 = dma.hbm_to_vmem [thread:$0]  %s288, 6144, %s290, [#allocation9], 384, 384, 24
        $region24: #{tpu_custom_call.1} parent=11 // pred_fallthru
          _
        // Predicated region
        $region25: #{tpu_custom_call.1} parent=11 // pred_check
          %p296 = pneg %p139
        $region26: #{tpu_custom_call.1} parent=11 // pred_check_branch
          %298 = sbr.rel (%p296) target = $region28
        $region27: #{tpu_custom_call.1} parent=11 // pred_region
          _
        $region28: #{tpu_custom_call.1} parent=11 // pred_fallthru
          _
      $region12: #{tpu_custom_call.1} parent=5 // pred_fallthru
        _
      %p299 = scmp.lt.s32.totalorder %s29, 2
      // Predicated region
      $region29: #{tpu_custom_call.1} parent=5 // pred_check
        %p300 = pneg %p299
      $region30: #{tpu_custom_call.1} parent=5 // pred_check_branch
        %302 = sbr.rel (%p300) target = $region32
      $region31: #{tpu_custom_call.1} parent=5 // pred_region
        // Predicated region
        $region33: #{tpu_custom_call.1} parent=31 // pred_check
          %p303 = pneg %p49
        $region34: #{tpu_custom_call.1} parent=31 // pred_check_branch
          %305 = sbr.rel (%p303) target = $region36
        $region35: #{tpu_custom_call.1} parent=31 // pred_region
          %s306 = sand.u32 %s39, 1
          %s307 = scalar_lea.sflag [#allocation3], %s306
          %s308 = sand.u32 %s39, 1
          %s309 = smul.addr %s308, 8
          %s310 = scalar_lea.vmem [#allocation2], %s309
          %312 = vsyncadd %s307, 0
          %s313 = smul.addr %s29, 8
          %s314 = scalar_lea.hbm %s0, %s313
          %s316 = sshll.u32 %s314, 4
          %s317 = int_to_ptr.hbm [resolvable:$true] %s316
          %s318 = sshll.u32 %s310, 4
          %s319 = int_to_ptr.vmem [resolvable:$true] %s318
          %321 = dma.hbm_to_vmem [thread:$0]  %s317, 128, %s319, %s307
        $region36: #{tpu_custom_call.1} parent=31 // pred_fallthru
          _
      $region32: #{tpu_custom_call.1} parent=5 // pred_fallthru
        _
      %p322 = scmp.le.s32.totalorder 1, %s29
      %p323 = scmp.lt.s32.totalorder %s29, 3
      %p324 = pnand %p322, %p323
      %p325 = pneg %p324
      // Predicated region
      $region37: #{tpu_custom_call.1} parent=5 // pred_check
        _
      $region38: #{tpu_custom_call.1} parent=5 // pred_check_branch
        %327 = sbr.rel (%p324) target = $region40
      $region39: #{tpu_custom_call.1} parent=5 // pred_region
        %s328 = ssub.s32 %s29, 1
        %s329 = sand.u32 %s42, 1
        %s330 = scalar_lea.sflag [#allocation3], %s329
        %s331 = sand.u32 %s42, 1
        %s332 = smul.addr %s331, 8
        %s333 = scalar_lea.vmem [#allocation2], %s332
        // Predicated region
        $region41: #{tpu_custom_call.1} parent=39 // pred_check
          %p334 = pneg %p55
        $region42: #{tpu_custom_call.1} parent=39 // pred_check_branch
          %336 = sbr.rel (%p334) target = $region44
        $region43: #{tpu_custom_call.1} parent=39 // pred_region
          %338 = dma.done %s330, 128
        $region44: #{tpu_custom_call.1} parent=39 // pred_fallthru
          _
        // Predicated region
        $region45: #{tpu_custom_call.1} parent=39 // pred_check
          %p339 = pneg %p76
        $region46: #{tpu_custom_call.1} parent=39 // pred_check_branch
          %341 = sbr.rel (%p339) target = $region48
        $region47: #{tpu_custom_call.1} parent=39 // pred_region
          %343 = dma.done [#allocation6], 16
        $region48: #{tpu_custom_call.1} parent=39 // pred_fallthru
          _
        // Predicated region
        $region49: #{tpu_custom_call.1} parent=39 // pred_check
          %p344 = pneg %p97
        $region50: #{tpu_custom_call.1} parent=39 // pred_check_branch
          %346 = sbr.rel (%p344) target = $region52
        $region51: #{tpu_custom_call.1} parent=39 // pred_region
          %348 = dma.done [#allocation6], 16
        $region52: #{tpu_custom_call.1} parent=39 // pred_fallthru
          _
        // Predicated region
        $region53: #{tpu_custom_call.1} parent=39 // pred_check
          %p349 = pneg %p118
        $region54: #{tpu_custom_call.1} parent=39 // pred_check_branch
          %351 = sbr.rel (%p349) target = $region56
        $region55: #{tpu_custom_call.1} parent=39 // pred_region
          %353 = dma.done [#allocation9], 6144
        $region56: #{tpu_custom_call.1} parent=39 // pred_fallthru
          _
        %s354 = sand.u32 %s42, 1
        %s355 = scalar_lea.sflag [#allocation3], %s354
        %s356 = sand.u32 %s42, 1
        %s357 = smul.addr %s356, 8
        %s358 = scalar_lea.vmem [#allocation2], %s357
        %p359 = pneg %p55
        %p360 = pneg %p52
        %p361 = pneg %p76
        %p362 = pneg %p73
        %p363 = pneg %p97
        %p364 = pneg %p94
        %p365 = pneg %p118
        %p366 = pneg %p115
        %p367 = pneg %p139
        %p368 = pneg %p136
        %p369 = pneg %p165
        %p370 = pneg %p162
        %s371 = sand.u32 %s152, 1
        %s372 = scalar_lea.sflag [#allocation4], %s371
        %s373 = sand.u32 %s152, 1
        %s374 = smul.addr %s373, 8
        %s375 = scalar_lea.vmem [#allocation10], %s374
        %p376 = pneg %p191
        %p377 = pneg %p188
        %s378 = sand.u32 %s34, 1
        %s379 = scalar_lea.sflag [#allocation12], %s378
        %s380 = sand.u32 %s178, 1
        %s381 = smul.addr %s380, 8
        %s382 = scalar_lea.vmem [#allocation11], %s381
        %p383 = pneg %p217
        %p384 = pneg %p214
        %s385 = sand.u32 %s34, 1
        %s386 = scalar_lea.sflag [#allocation12], %s385
        %s387 = sand.u32 %s204, 1
        %s388 = smul.addr %s387, 8
        %s389 = scalar_lea.vmem [#allocation13], %s388
        %p390 = pneg %p243
        %p391 = pneg %p240
        %s392 = sand.u32 %s230, 1
        %s393 = scalar_lea.sflag [#allocation15], %s392
        %s394 = sand.u32 %s230, 1
        %s395 = smul.addr %s394, 8
        %s396 = scalar_lea.vmem [#allocation14], %s395
        %v397 = vld [vmem:[%s333] sm:$0xff]
        %398 = vadd.xlane.f32.xlu0 %v397
        %v399 = vpop.xlane.xlu0 %398
        %v400 = vrcp.pop 128.0
        %v401 = vmul.f32 128.0, %v400
        %v402 = vsub.f32 1.0, %v401
        %v403 = vmul.f32 %v400, %v402
        %v404 = vadd.f32 %v400, %v403
        %vm405 = vweird.f32 %v400
        %v406 = vsel %vm405, %v400, %v404
        %v407 = vmul.f32 %v399, %v406
        %v408 = vsub.f32 %v397, %v407
        %v409 = vmul.f32 %v408, %v408
        %410 = vadd.xlane.f32.xlu0 %v409
        %v411 = vpop.xlane.xlu0 %410
        %v412 = vmul.f32 %v411, %v406
        %v413 = vadd.f32 %v412, 1e-12
        %v414 = vrsqrt.pop %v413
        %v415 = vmul.f32 %v414, %v413
        %v416 = vmul.f32 %v415, %v414
        %v417 = vmul.f32 0.5, %v416
        %v418 = vsub.f32 1.5, %v417
        %v419 = vmul.f32 %v414, %v418
        %vm420 = vweird.f32 %v413
        %vm421 = vweird.f32 %v414
        %vm422 = vmor %vm420, %vm421
        %v423 = vsel %vm422, %v414, %v419
        %v424 = vmul.f32 %v408, %v423
        %v425 = vld [vmem:[#allocation5] sm:$0x1]
        %v427 = vperm.slane %v425, 0
        %v429 = vmul.f32 %v424, %v427
        %v430 = vld [vmem:[#allocation7] sm:$0x1]
        %v432 = vperm.slane %v430, 0
        %v434 = vadd.f32 %v429, %v432
        %435 = vst [vmem:[%s375] sm:$0xff] %v434
        %v436 = vld [vmem:[#allocation8] sm:$0xff]
        %v437 = vld [vmem:[#allocation8 + $0x8] sm:$0xff]
        %v438 = vld [vmem:[#allocation8 + $0x10] sm:$0xff]
        %v439 = vld [vmem:[#allocation8 + $0x18] sm:$0xff]
        %v440 = vld [vmem:[#allocation8 + $0x20] sm:$0xff]
        %v441 = vld [vmem:[#allocation8 + $0x28] sm:$0xff]
        %v442 = vld [vmem:[#allocation8 + $0x30] sm:$0xff]
        %v443 = vld [vmem:[#allocation8 + $0x38] sm:$0xff]
        %v444 = vld [vmem:[#allocation8 + $0x40] sm:$0xff]
        %v445 = vld [vmem:[#allocation8 + $0x48] sm:$0xff]
        %v446 = vld [vmem:[#allocation8 + $0x50] sm:$0xff]
        %v447 = vld [vmem:[#allocation8 + $0x58] sm:$0xff]
        %v448 = vld [vmem:[#allocation8 + $0x60] sm:$0xff]
        %v449 = vld [vmem:[#allocation8 + $0x68] sm:$0xff]
        %v450 = vld [vmem:[#allocation8 + $0x70] sm:$0xff]
        %v451 = vld [vmem:[#allocation8 + $0x78] sm:$0xff]
        %v452 = vld [vmem:[#allocation8 + $0x80] sm:$0xff]
        %v453 = vld [vmem:[#allocation8 + $0x88] sm:$0xff]
        %v454 = vld [vmem:[#allocation8 + $0x90] sm:$0xff]
        %v455 = vld [vmem:[#allocation8 + $0x98] sm:$0xff]
        %v456 = vld [vmem:[#allocation8 + $0xa0] sm:$0xff]
        %v457 = vld [vmem:[#allocation8 + $0xa8] sm:$0xff]
        %v458 = vld [vmem:[#allocation8 + $0xb0] sm:$0xff]
        %v459 = vld [vmem:[#allocation8 + $0xb8] sm:$0xff]
        %v460 = vld [vmem:[#allocation8 + $0xc0] sm:$0xff]
        %v461 = vld [vmem:[#allocation8 + $0xc8] sm:$0xff]
        %v462 = vld [vmem:[#allocation8 + $0xd0] sm:$0xff]
        %v463 = vld [vmem:[#allocation8 + $0xd8] sm:$0xff]
        %v464 = vld [vmem:[#allocation8 + $0xe0] sm:$0xff]
        %v465 = vld [vmem:[#allocation8 + $0xe8] sm:$0xff]
        %v466 = vld [vmem:[#allocation8 + $0xf0] sm:$0xff]
        %v467 = vld [vmem:[#allocation8 + $0xf8] sm:$0xff]
        %v468 = vld [vmem:[#allocation8 + $0x100] sm:$0xff]
        %v469 = vld [vmem:[#allocation8 + $0x108] sm:$0xff]
        %v470 = vld [vmem:[#allocation8 + $0x110] sm:$0xff]
        %v471 = vld [vmem:[#allocation8 + $0x118] sm:$0xff]
        %v472 = vld [vmem:[#allocation8 + $0x120] sm:$0xff]
        %v473 = vld [vmem:[#allocation8 + $0x128] sm:$0xff]
        %v474 = vld [vmem:[#allocation8 + $0x130] sm:$0xff]
        %v475 = vld [vmem:[#allocation8 + $0x138] sm:$0xff]
        %v476 = vld [vmem:[#allocation8 + $0x140] sm:$0xff]
        %v477 = vld [vmem:[#allocation8 + $0x148] sm:$0xff]
        %v478 = vld [vmem:[#allocation8 + $0x150] sm:$0xff]
        %v479 = vld [vmem:[#allocation8 + $0x158] sm:$0xff]
        %v480 = vld [vmem:[#allocation8 + $0x160] sm:$0xff]
        %v481 = vld [vmem:[#allocation8 + $0x168] sm:$0xff]
        %v482 = vld [vmem:[#allocation8 + $0x170] sm:$0xff]
        %v483 = vld [vmem:[#allocation8 + $0x178] sm:$0xff]
        %v484 = vld [vmem:[%s4] sm:$0x7]
        %v486 = vperm.slane %v484, 0
        %v487 = vperm.slane %v484, 1
        %v488 = vperm.slane %v484, 2
        %492 = vmatpush.msra.mxu0 %v481
        %493 = vmatpush.msra.mxu0 %v478
        %494 = vmatpush.msra.mxu0 %v475
        %495 = vmatpush.msra.mxu0 %v472
        %496 = vmatpush.msra.mxu0 %v469
        %497 = vmatpush.msra.mxu0 %v466
        %498 = vmatpush.msra.mxu0 %v463
        %499 = vmatpush.msra.mxu0 %v460
        %500 = vmatpush.msra.mxu0 %v457
        %501 = vmatpush.msra.mxu0 %v454
        %502 = vmatpush.msra.mxu0 %v451
        %503 = vmatpush.msra.mxu0 %v448
        %504 = vmatpush.msra.mxu0 %v445
        %505 = vmatpush.msra.mxu0 %v442
        %506 = vmatpush.msra.mxu0 %v439
        %507 = vmatpush.msra.mxu0 %v436
        %508 = vmatmul.f32.gmra.mxu0 %v434
        %v509 = vpop.f32.mrf.mxu0
        %v510 = vadd.f32 %v486, %v509
        %511 = vdwg.mxu0
        %512 = vmatpush.msra.mxu0 %v482
        %513 = vmatpush.msra.mxu0 %v479
        %514 = vmatpush.msra.mxu0 %v476
        %515 = vmatpush.msra.mxu0 %v473
        %516 = vmatpush.msra.mxu0 %v470
        %517 = vmatpush.msra.mxu0 %v467
        %518 = vmatpush.msra.mxu0 %v464
        %519 = vmatpush.msra.mxu0 %v461
        %520 = vmatpush.msra.mxu0 %v458
        %521 = vmatpush.msra.mxu0 %v455
        %522 = vmatpush.msra.mxu0 %v452
        %523 = vmatpush.msra.mxu0 %v449
        %524 = vmatpush.msra.mxu0 %v446
        %525 = vmatpush.msra.mxu0 %v443
        %526 = vmatpush.msra.mxu0 %v440
        %527 = vmatpush.msra.mxu0 %v437
        %528 = vmatmul.f32.gmra.mxu0 %v434
        %v529 = vpop.f32.mrf.mxu0
        %v530 = vadd.f32 %v487, %v529
        %531 = vdwg.mxu0
        %532 = vmatpush.msra.mxu0 %v483
        %533 = vmatpush.msra.mxu0 %v480
        %534 = vmatpush.msra.mxu0 %v477
        %535 = vmatpush.msra.mxu0 %v474
        %536 = vmatpush.msra.mxu0 %v471
        %537 = vmatpush.msra.mxu0 %v468
        %538 = vmatpush.msra.mxu0 %v465
        %539 = vmatpush.msra.mxu0 %v462
        %540 = vmatpush.msra.mxu0 %v459
        %541 = vmatpush.msra.mxu0 %v456
        %542 = vmatpush.msra.mxu0 %v453
        %543 = vmatpush.msra.mxu0 %v450
        %544 = vmatpush.msra.mxu0 %v447
        %545 = vmatpush.msra.mxu0 %v444
        %546 = vmatpush.msra.mxu0 %v441
        %547 = vmatpush.msra.mxu0 %v438
        %548 = vmatmul.f32.gmra.mxu0 %v434
        %v549 = vpop.f32.mrf.mxu0
        %v550 = vadd.f32 %v488, %v549
        %551 = vdwg.mxu0
        %552 = vst [vmem:[%s382] sm:$0xff] %v510
        %553 = vst [vmem:[%s389] sm:$0xff] %v530
        %554 = vst [vmem:[%s396] sm:$0xff] %v550
        %s555 = sand.u32 %s152, 1
        %s556 = scalar_lea.sflag [#allocation4], %s555
        %s557 = sand.u32 %s152, 1
        %s558 = smul.addr %s557, 8
        %s559 = scalar_lea.vmem [#allocation10], %s558
        %s560 = sand.u32 %s34, 1
        %s561 = scalar_lea.sflag [#allocation12], %s560
        %s562 = sand.u32 %s178, 1
        %s563 = smul.addr %s562, 8
        %s564 = scalar_lea.vmem [#allocation11], %s563
        %s565 = sand.u32 %s34, 1
        %s566 = scalar_lea.sflag [#allocation12], %s565
        %s567 = sand.u32 %s204, 1
        %s568 = smul.addr %s567, 8
        %s569 = scalar_lea.vmem [#allocation13], %s568
        %s570 = sand.u32 %s230, 1
        %s571 = scalar_lea.sflag [#allocation15], %s570
        %s572 = sand.u32 %s230, 1
        %s573 = smul.addr %s572, 8
        %s574 = scalar_lea.vmem [#allocation14], %s573
        // Predicated region
        $region57: #{tpu_custom_call.1} parent=39 // pred_check
          %p575 = pneg %p162
        $region58: #{tpu_custom_call.1} parent=39 // pred_check_branch
          %577 = sbr.rel (%p575) target = $region60
        $region59: #{tpu_custom_call.1} parent=39 // pred_region
          %579 = vsyncadd %s556, 0
          %s580 = smul.addr %s34, 8
          %s581 = scalar_lea.hbm %s5, %s580
          %s583 = sshll.u32 %s559, 4
          %s584 = int_to_ptr.vmem [resolvable:$true] %s583
          %s585 = sshll.u32 %s581, 4
          %s586 = int_to_ptr.hbm [resolvable:$true] %s585
          %588 = dma.vmem_to_hbm [thread:$0]  %s584, 128, %s586, %s556
        $region60: #{tpu_custom_call.1} parent=39 // pred_fallthru
          _
        // Predicated region
        $region61: #{tpu_custom_call.1} parent=39 // pred_check
          %p589 = pneg %p188
        $region62: #{tpu_custom_call.1} parent=39 // pred_check_branch
          %591 = sbr.rel (%p589) target = $region64
        $region63: #{tpu_custom_call.1} parent=39 // pred_region
          %593 = vsyncadd %s561, 0
          %s594 = smul.addr %s34, 8
          %s595 = scalar_lea.hbm %s6, %s594
          %s597 = sshll.u32 %s564, 4
          %s598 = int_to_ptr.vmem [resolvable:$true] %s597
          %s599 = sshll.u32 %s595, 4
          %s600 = int_to_ptr.hbm [resolvable:$true] %s599
          %602 = dma.vmem_to_hbm [thread:$0]  %s598, 128, %s600, %s561
        $region64: #{tpu_custom_call.1} parent=39 // pred_fallthru
          _
        // Predicated region
        $region65: #{tpu_custom_call.1} parent=39 // pred_check
          %p603 = pneg %p214
        $region66: #{tpu_custom_call.1} parent=39 // pred_check_branch
          %605 = sbr.rel (%p603) target = $region68
        $region67: #{tpu_custom_call.1} parent=39 // pred_region
          %607 = vsyncadd %s566, 0
          %s608 = smul.addr %s34, 8
          %s609 = scalar_lea.hbm %s7, %s608
          %s611 = sshll.u32 %s569, 4
          %s612 = int_to_ptr.vmem [resolvable:$true] %s611
          %s613 = sshll.u32 %s609, 4
          %s614 = int_to_ptr.hbm [resolvable:$true] %s613
          %616 = dma.vmem_to_hbm [thread:$0]  %s612, 128, %s614, %s566
        $region68: #{tpu_custom_call.1} parent=39 // pred_fallthru
          _
        // Predicated region
        $region69: #{tpu_custom_call.1} parent=39 // pred_check
          %p617 = pneg %p240
        $region70: #{tpu_custom_call.1} parent=39 // pred_check_branch
          %619 = sbr.rel (%p617) target = $region72
        $region71: #{tpu_custom_call.1} parent=39 // pred_region
          %621 = vsyncadd %s571, 0
          %s622 = smul.addr %s34, 8
          %s623 = scalar_lea.hbm %s8, %s622
          %s625 = sshll.u32 %s574, 4
          %s626 = int_to_ptr.vmem [resolvable:$true] %s625
          %s627 = sshll.u32 %s623, 4
          %s628 = int_to_ptr.hbm [resolvable:$true] %s627
          %630 = dma.vmem_to_hbm [thread:$0]  %s626, 128, %s628, %s571
        $region72: #{tpu_custom_call.1} parent=39 // pred_fallthru
          _
      $region40: #{tpu_custom_call.1} parent=5 // pred_fallthru
        _
      %p631 = scmp.le.s32.totalorder 2, %s29
      // Predicated region
      $region73: #{tpu_custom_call.1} parent=5 // pred_check
        %p632 = pneg %p631
      $region74: #{tpu_custom_call.1} parent=5 // pred_check_branch
        %634 = sbr.rel (%p632) target = $region76
      $region75: #{tpu_custom_call.1} parent=5 // pred_region
        %s635 = ssub.s32 %s29, 2
        // Predicated region
        $region77: #{tpu_custom_call.1} parent=75 // pred_check
          %p636 = pneg %p168
        $region78: #{tpu_custom_call.1} parent=75 // pred_check_branch
          %638 = sbr.rel (%p636) target = $region80
        $region79: #{tpu_custom_call.1} parent=75 // pred_region
          %s639 = sand.u32 %s153, 1
          %s640 = scalar_lea.sflag [#allocation4], %s639
          %s641 = sand.u32 %s153, 1
          %s642 = smul.addr %s641, 8
          %s643 = scalar_lea.vmem [#allocation10], %s642
          %645 = dma.done %s640, 128
        $region80: #{tpu_custom_call.1} parent=75 // pred_fallthru
          _
        // Predicated region
        $region81: #{tpu_custom_call.1} parent=75 // pred_check
          %p646 = pneg %p194
        $region82: #{tpu_custom_call.1} parent=75 // pred_check_branch
          %648 = sbr.rel (%p646) target = $region84
        $region83: #{tpu_custom_call.1} parent=75 // pred_region
          %s649 = sand.u32 %s35, 1
          %s650 = scalar_lea.sflag [#allocation12], %s649
          %s651 = sand.u32 %s179, 1
          %s652 = smul.addr %s651, 8
          %s653 = scalar_lea.vmem [#allocation11], %s652
          %655 = dma.done %s650, 128
        $region84: #{tpu_custom_call.1} parent=75 // pred_fallthru
          _
        // Predicated region
        $region85: #{tpu_custom_call.1} parent=75 // pred_check
          %p656 = pneg %p220
        $region86: #{tpu_custom_call.1} parent=75 // pred_check_branch
          %658 = sbr.rel (%p656) target = $region88
        $region87: #{tpu_custom_call.1} parent=75 // pred_region
          %s659 = sand.u32 %s35, 1
          %s660 = scalar_lea.sflag [#allocation12], %s659
          %s661 = sand.u32 %s205, 1
          %s662 = smul.addr %s661, 8
          %s663 = scalar_lea.vmem [#allocation13], %s662
          %665 = dma.done %s660, 128
        $region88: #{tpu_custom_call.1} parent=75 // pred_fallthru
          _
        // Predicated region
        $region89: #{tpu_custom_call.1} parent=75 // pred_check
          %p666 = pneg %p246
        $region90: #{tpu_custom_call.1} parent=75 // pred_check_branch
          %668 = sbr.rel (%p666) target = $region92
        $region91: #{tpu_custom_call.1} parent=75 // pred_region
          %s669 = sand.u32 %s231, 1
          %s670 = scalar_lea.sflag [#allocation15], %s669
          %s671 = sand.u32 %s231, 1
          %s672 = smul.addr %s671, 8
          %s673 = scalar_lea.vmem [#allocation14], %s672
          %675 = dma.done %s670, 128
        $region92: #{tpu_custom_call.1} parent=75 // pred_fallthru
          _
      $region76: #{tpu_custom_call.1} parent=5 // pred_fallthru
        _
    $region6: #{tpu_custom_call.1} parent=1 // loop_footer
      %s33 = sadd.s32 1, %s29
    $region7: #{tpu_custom_call.1} parent=1 // loop_footer_branch
      %28 = sbr.rel target = $region3
    $region8: #{tpu_custom_call.1} parent=1 // loop_exit
      _
    %676 = vsyncpa [#allocation3], 1
    %s677 = scalar_lea.sflag [#allocation3], 1
    %678 = vsyncpa %s677, 1
    %679 = vsyncpa [#allocation6], 1
    %680 = vsyncpa [#allocation9], 1
    %681 = vsyncpa [#allocation4], 1
    %s682 = scalar_lea.sflag [#allocation4], 1
    %683 = vsyncpa %s682, 1
    %684 = vsyncpa [#allocation12], 1
    %s685 = scalar_lea.sflag [#allocation12], 1
    %686 = vsyncpa %s685, 1
    %687 = vsyncpa [#allocation15], 1
    %s688 = scalar_lea.sflag [#allocation15], 1
    %689 = vsyncpa %s688, 1

</llo_original>
